<compile_context>
chip_gen: v7x
topology: tpu7x:2x2x1
jax: 0.10.0
libtpu: 0.0.40
codegen_flags: <defaults>
</compile_context>

<pallas_src>
import functools

import jax
import jax.numpy as jnp
from jax import lax
from jax.experimental import pallas as pl
from jax.experimental.pallas import tpu as pltpu


def _round_up(x, m):
    return ((x + m - 1) // m) * m


# ----------------------------------------------------------------------------
# Kernel: one batch tile.
#   x_ref  : (TB, S)   state tile, batch-major (padded batch rows)
#   w1_ref : (H, S)    fc1 weight (PyTorch layout)
#   b1_ref : (H, 1)    fc1 bias (column)
#   w2_ref : (H, H)    fc2 weight
#   b2_ref : (H, 1)    fc2 bias (column)
#   w3_ref : (H, 1)    fc3 weight (column)
#   b3_ref : (1, 1)    fc3 bias (SMEM scalar)
#   o_ref  : (1, TB)   lane-dense value output
# ----------------------------------------------------------------------------
def critic_kernel(x_ref, w1_ref, b1_ref, w2_ref, b2_ref, w3_ref, b3_ref, o_ref,
                  *, tanh_bf16):
    def act(z):
        if tanh_bf16:
            # bf16 EUP tanh (v6e/v7x); matmul accumulation stays f32.
            return jnp.tanh(z.astype(jnp.bfloat16)).astype(jnp.float32)
        return jnp.tanh(z)

    x = x_ref[...]                                                  # (TB, S)
    # h1 = W1 @ x^T + b1 : contract S of W1(H,S) with S of x(TB,S) -> (H, TB)
    z1 = lax.dot_general(w1_ref[...], x, (((1,), (1,)), ((), ())),
                         preferred_element_type=jnp.float32)
    h1 = act(z1 + b1_ref[...])                                      # (H, TB)
    z2 = jnp.dot(w2_ref[...], h1, preferred_element_type=jnp.float32)
    h2 = act(z2 + b2_ref[...])                                      # (H, TB)
    # fc3 (H -> 1): VPU multiply + cross-sublane reduce -> lane-dense row.
    out_row = jnp.sum(h2 * w3_ref[...], axis=0, keepdims=True) + b3_ref[0, 0]
    o_ref[...] = out_row.astype(o_ref.dtype)                        # (1, TB)


# ----------------------------------------------------------------------------
# Plain fused-XLA path (small-batch fallback; also the correctness reference).
# ----------------------------------------------------------------------------
def _mlp_xla(s, w1, b1, w2, b2, w3, b3):
    h1 = jnp.tanh(s @ w1.T + b1)
    h2 = jnp.tanh(h1 @ w2.T + b2)
    return h2 @ w3.T + b3


# ----------------------------------------------------------------------------
# Wrapper: parameters in PyTorch layout, returns (B, 1) values.
# ----------------------------------------------------------------------------
@functools.partial(jax.jit,
                   static_argnames=("block_b", "tanh_bf16", "force_pallas"))
def critic_forward(s, w1, b1, w2, b2, w3, b3, *, block_b=512, tanh_bf16=False,
                   force_pallas=False):
    """s: (B, S) f32; w1:(H,S) b1:(H,) w2:(H,H) b2:(H,) w3:(1,H) b3:(1,)."""
    B, S = s.shape
    H = w1.shape[0]

    s = s.astype(jnp.float32)
    w1k = w1.astype(jnp.float32)                     # (H, S)
    w2k = w2.astype(jnp.float32)                     # (H, H)
    b1f = b1.astype(jnp.float32)
    b2f = b2.astype(jnp.float32)
    w3f = w3.astype(jnp.float32)
    b3f = b3.astype(jnp.float32)

    # Small-batch fallback: pallas_call fixed dispatch + 128-lane padding
    # dwarfs the math at tiny B; the fused XLA MLP wins there.
    if B <= 128 and not force_pallas:
        return _mlp_xla(s, w1k, b1f, w2k, b2f, w3f, b3f)

    # Batch tile: >= 128 lanes; for B > 128 pick >= 2 tiles (so the parallel
    # grid axis can shard across both v7x TensorCores); cap at block_b=512
    # to stay out of the vreg-spill regime (h1/h2 live intermediates).
    tb = min(block_b, max(128, _round_up(-(-B // 2), 128)))
    b_pad = _round_up(B, tb)
    grid = b_pad // tb

    # Batch-major input; pad batch axis only (no wrapper transpose HLO).
    x = s if b_pad == B else jnp.pad(s, ((0, b_pad - B), (0, 0)))

    b1k = b1f.reshape(H, 1)                          # (H, 1)
    b2k = b2f.reshape(H, 1)                          # (H, 1)
    w3k = w3f.reshape(H, 1)                          # (H, 1) column
    b3k = b3f.reshape(1, 1)                          # (1, 1) scalar -> SMEM

    kernel = functools.partial(critic_kernel, tanh_bf16=tanh_bf16)

    out_row = pl.pallas_call(
        kernel,
        out_shape=jax.ShapeDtypeStruct((1, b_pad), jnp.float32),
        grid=(grid,),
        in_specs=[
            pl.BlockSpec((tb, S), lambda i: (i, 0)),          # x: streamed tiles
            pl.BlockSpec((H, S), lambda i: (0, 0)),           # w1: resident
            pl.BlockSpec((H, 1), lambda i: (0, 0)),           # b1: resident
            pl.BlockSpec((H, H), lambda i: (0, 0)),           # w2: resident
            pl.BlockSpec((H, 1), lambda i: (0, 0)),           # b2: resident
            pl.BlockSpec((H, 1), lambda i: (0, 0)),           # w3: resident
            pl.BlockSpec((1, 1), lambda i: (0, 0),
                         memory_space=pltpu.MemorySpace.SMEM),  # b3 scalar
        ],
        out_specs=pl.BlockSpec((1, tb), lambda i: (0, i)),    # lane-dense output
        compiler_params=pltpu.CompilerParams(
            dimension_semantics=("parallel",)),
    )(x, w1k, b1k, w2k, b2k, w3k, b3k)

    # (1, B_pad) lane-dense row -> (B, 1) like the PyTorch module.
    return out_row[0, :B].reshape(B, 1)


# ----------------------------------------------------------------------------
# Deterministic parameter init (orthogonal weights, zero bias), mirrors
# nn.init.orthogonal_ on a (out_features, in_features) weight matrix.
# ----------------------------------------------------------------------------
def orthogonal(key, out_features, in_features, gain=1.0):
    rows, cols = out_features, in_features
    flat = jax.random.normal(key, (max(rows, cols), min(rows, cols)),
                             dtype=jnp.float32)
    q, r = jnp.linalg.qr(flat)
    d = jnp.sign(jnp.diagonal(r))
    q = q * d[None, :]
    if rows < cols:
        q = q.T
    return gain * q[:rows, :cols]                    # (out, in), PyTorch layout


def make_critic_params(key, state_dim, hidden_width):
    k1, k2, k3 = jax.random.split(key, 3)
    return dict(
        w1=orthogonal(k1, hidden_width, state_dim),            # (H, S)
        b1=jnp.zeros((hidden_width,), jnp.float32),
        w2=orthogonal(k2, hidden_width, hidden_width),          # (H, H)
        b2=jnp.zeros((hidden_width,), jnp.float32),
        w3=orthogonal(k3, 1, hidden_width),                     # (1, H)
        b3=jnp.zeros((1,), jnp.float32),
    )


def critic_forward_ref(s, p):
    return _mlp_xla(s, p["w1"], p["b1"], p["w2"], p["b2"], p["w3"], p["b3"])


if __name__ == "__main__":
    key = jax.random.PRNGKey(0)
    k_params, k_small, k_large = jax.random.split(key, 3)

    STATE_DIM = 16      # args.state_dim
    HIDDEN = 32         # args.hidden_width

    params = make_critic_params(k_params, STATE_DIM, HIDDEN)
    args = (params["w1"], params["b1"], params["w2"], params["b2"],
            params["w3"], params["b3"])

    # 1) Small batch, force the Pallas path (single 128-lane tile).
    s_small = jax.random.normal(k_small, (8, STATE_DIM), dtype=jnp.float32)
    out_small = jax.block_until_ready(
        critic_forward(s_small, *args, force_pallas=True))
    ref_small = critic_forward_ref(s_small, params)
    assert out_small.shape == (8, 1), out_small.shape
    assert jnp.allclose(out_small, ref_small, atol=1e-5, rtol=1e-5)

    # 2) Larger, non-aligned batch: exercises batch padding and a 2-step
    #    parallel grid (both v7x TensorCores get work).
    s_large = jax.random.normal(k_large, (300, STATE_DIM), dtype=jnp.float32)
    out_large = jax.block_until_ready(critic_forward(s_large, *args))
    ref_large = critic_forward_ref(s_large, params)
    assert out_large.shape == (300, 1), out_large.shape
    assert jnp.allclose(out_large, ref_large, atol=1e-5, rtol=1e-5)

    # 3) Default small-batch path (fused XLA fallback) still matches.
    out_fb = jax.block_until_ready(critic_forward(s_small, *args))
    assert jnp.allclose(out_fb, ref_small, atol=1e-5, rtol=1e-5)

    print("KERNEL_OK")
</pallas_src>

<mosaic_0001>
module attributes {stable_mosaic.version = 11 : i64} {
  func.func @critic_kernel(%arg0: i32, %arg1: memref<128x16xf32, #tpu.memory_space<vmem>>, %arg2: memref<32x16xf32, #tpu.memory_space<vmem>>, %arg3: memref<32x1xf32, #tpu.memory_space<vmem>>, %arg4: memref<32x32xf32, #tpu.memory_space<vmem>>, %arg5: memref<32x1xf32, #tpu.memory_space<vmem>>, %arg6: memref<32x1xf32, #tpu.memory_space<vmem>>, %arg7: memref<1x1xf32, #tpu.memory_space<smem>>, %arg8: memref<1x128xf32, #tpu.memory_space<vmem>>) attributes {dimension_semantics = [#tpu.dimension_semantics<parallel>], iteration_bounds = array<i64: 1>, scalar_prefetch = 0 : i64, scratch_operands = 0 : i64, tpu.core_type = #tpu.core_type<tc>, window_params = [{transform_indices = @transform_0, window_bounds = array<i64: 128, 16>}, {pipeline_mode = #tpu.pipeline_mode<synchronous>, transform_indices = @transform_1, window_bounds = array<i64: 32, 16>}, {pipeline_mode = #tpu.pipeline_mode<synchronous>, transform_indices = @transform_2, window_bounds = array<i64: 32, 1>}, {pipeline_mode = #tpu.pipeline_mode<synchronous>, transform_indices = @transform_3, window_bounds = array<i64: 32, 32>}, {pipeline_mode = #tpu.pipeline_mode<synchronous>, transform_indices = @transform_4, window_bounds = array<i64: 32, 1>}, {pipeline_mode = #tpu.pipeline_mode<synchronous>, transform_indices = @transform_5, window_bounds = array<i64: 32, 1>}, {transform_indices = @transform_6, window_bounds = array<i64: 1, 1>}, {transform_indices = @transform_7, window_bounds = array<i64: 1, 128>}]} {
    %c0 = arith.constant 0 : index
    %c0_0 = arith.constant 0 : index
    %0 = vector.load %arg1[%c0, %c0_0] : memref<128x16xf32, #tpu.memory_space<vmem>>, vector<128x16xf32>
    %c0_1 = arith.constant 0 : index
    %c0_2 = arith.constant 0 : index
    %1 = vector.load %arg2[%c0_1, %c0_2] : memref<32x16xf32, #tpu.memory_space<vmem>>, vector<32x16xf32>
    %cst = arith.constant dense<0.000000e+00> : vector<32x128xf32>
    %2 = tpu.matmul %1, %0, %cst {dimension_numbers = #tpu.dot_dimension_numbers<[1], [1], [0], [0], [0, 0, 1, 0], [], []>} : vector<32x16xf32>, vector<128x16xf32>, vector<32x128xf32> -> vector<32x128xf32>
    %c0_3 = arith.constant 0 : index
    %c0_4 = arith.constant 0 : index
    %3 = vector.load %arg3[%c0_3, %c0_4] : memref<32x1xf32, #tpu.memory_space<vmem>>, vector<32x1xf32>
    %4 = vector.broadcast %3 : vector<32x1xf32> to vector<32x128xf32>
    %5 = arith.addf %2, %4 : vector<32x128xf32>
    %6 = math.tanh %5 : vector<32x128xf32>
    %c0_5 = arith.constant 0 : index
    %c0_6 = arith.constant 0 : index
    %7 = vector.load %arg4[%c0_5, %c0_6] : memref<32x32xf32, #tpu.memory_space<vmem>>, vector<32x32xf32>
    %cst_7 = arith.constant dense<0.000000e+00> : vector<32x128xf32>
    %8 = tpu.matmul %7, %6, %cst_7 {dimension_numbers = #tpu.dot_dimension_numbers<[1], [0], [0], [1], [0, 0, 1, 1], [], []>} : vector<32x32xf32>, vector<32x128xf32>, vector<32x128xf32> -> vector<32x128xf32>
    %c0_8 = arith.constant 0 : index
    %c0_9 = arith.constant 0 : index
    %9 = vector.load %arg5[%c0_8, %c0_9] : memref<32x1xf32, #tpu.memory_space<vmem>>, vector<32x1xf32>
    %10 = vector.broadcast %9 : vector<32x1xf32> to vector<32x128xf32>
    %11 = arith.addf %8, %10 : vector<32x128xf32>
    %12 = math.tanh %11 : vector<32x128xf32>
    %c0_10 = arith.constant 0 : index
    %c0_11 = arith.constant 0 : index
    %13 = vector.load %arg6[%c0_10, %c0_11] : memref<32x1xf32, #tpu.memory_space<vmem>>, vector<32x1xf32>
    %14 = vector.broadcast %13 : vector<32x1xf32> to vector<32x128xf32>
    %15 = arith.mulf %12, %14 : vector<32x128xf32>
    %cst_12 = arith.constant dense<0.000000e+00> : vector<128xf32>
    %16 = vector.multi_reduction <add>, %15, %cst_12 [0] : vector<32x128xf32> to vector<128xf32>
    %17 = vector.shape_cast %16 : vector<128xf32> to vector<1x128xf32>
    %c0_13 = arith.constant 0 : index
    %c0_14 = arith.constant 0 : index
    %18 = memref.load %arg7[%c0_13, %c0_14] : memref<1x1xf32, #tpu.memory_space<smem>>
    %19 = vector.broadcast %18 : f32 to vector<1x128xf32>
    %20 = arith.addf %17, %19 : vector<1x128xf32>
    %c0_15 = arith.constant 0 : index
    %c0_16 = arith.constant 0 : index
    %21 = vector.load %arg8[%c0_15, %c0_16] : memref<1x128xf32, #tpu.memory_space<vmem>>, vector<1x128xf32>
    tpu.vector_store %arg8[%c0_15, %c0_16], %20 {strides = array<i32>} : memref<1x128xf32, #tpu.memory_space<vmem>>, vector<1x128xf32>,
    return
  }
  func.func @transform_0(%arg0: i32) -> (i32, i32) {
    %c0_i32 = arith.constant 0 : i32
    %c0_i32_0 = arith.constant 0 : i32
    return %arg0, %c0_i32 : i32, i32
  }
  func.func @transform_1(%arg0: i32) -> (i32, i32) {
    %c0_i32 = arith.constant 0 : i32
    %c0_i32_0 = arith.constant 0 : i32
    %c0_i32_1 = arith.constant 0 : i32
    return %c0_i32, %c0_i32_0 : i32, i32
  }
  func.func @transform_2(%arg0: i32) -> (i32, i32) {
    %c0_i32 = arith.constant 0 : i32
    %c0_i32_0 = arith.constant 0 : i32
    %c0_i32_1 = arith.constant 0 : i32
    return %c0_i32, %c0_i32_0 : i32, i32
  }
  func.func @transform_3(%arg0: i32) -> (i32, i32) {
    %c0_i32 = arith.constant 0 : i32
    %c0_i32_0 = arith.constant 0 : i32
    %c0_i32_1 = arith.constant 0 : i32
    return %c0_i32, %c0_i32_0 : i32, i32
  }
  func.func @transform_4(%arg0: i32) -> (i32, i32) {
    %c0_i32 = arith.constant 0 : i32
    %c0_i32_0 = arith.constant 0 : i32
    %c0_i32_1 = arith.constant 0 : i32
    return %c0_i32, %c0_i32_0 : i32, i32
  }
  func.func @transform_5(%arg0: i32) -> (i32, i32) {
    %c0_i32 = arith.constant 0 : i32
    %c0_i32_0 = arith.constant 0 : i32
    %c0_i32_1 = arith.constant 0 : i32
    return %c0_i32, %c0_i32_0 : i32, i32
  }
  func.func @transform_6(%arg0: i32) -> (i32, i32) {
    %c0_i32 = arith.constant 0 : i32
    %c0_i32_0 = arith.constant 0 : i32
    %c0_i32_1 = arith.constant 0 : i32
    return %c0_i32, %c0_i32_0 : i32, i32
  }
  func.func @transform_7(%arg0: i32) -> (i32, i32) {
    %c0_i32 = arith.constant 0 : i32
    %c0_i32_0 = arith.constant 0 : i32
    return %c0_i32, %arg0 : i32, i32
  }
}

</mosaic_0001>

<llo_original>
// kernel: critic_forward.1
$region0: #{critic_forward.1}
  #allocation0 [shape = 'u32[]', space=smem, size = 0x4, offset = 0x4, fixed_abs, tag = 'smem constant byte address 0x4 - core index']
  #allocation1 [shape = 'u32[144,128]{1,0:T(1,128)}', space=vmem, size = 0x12000, scoped, tag = 'internal scratch']
  #allocation2 [shape = 'f32[1,1]{1,0:T(1,128)S(6)}', space=smem, size = 0x200, scoped, tag = 'scoped memory for critic_forward.1']
  %s0 = inlined_call_operand.vmem [shape: f32[128,16], index: 0, kind: input, shape index: {}]
  %s1 = inlined_call_operand.vmem [shape: f32[32,16], index: 1, kind: input, shape index: {}]
  %s2 = inlined_call_operand.vmem [shape: f32[32,1], index: 2, kind: input, shape index: {}]
  %s3 = inlined_call_operand.vmem [shape: f32[32,32], index: 3, kind: input, shape index: {}]
  %s4 = inlined_call_operand.vmem [shape: f32[32,1], index: 4, kind: input, shape index: {}]
  %s5 = inlined_call_operand.vmem [shape: f32[32,1], index: 5, kind: input, shape index: {}]
  %s6 = inlined_call_operand.<no memory space> [shape: f32[1,1], index: 6, kind: input, shape index: {}]
  %s7 = inlined_call_operand.vmem [shape: f32[1,128], index: 7, kind: output, shape index: {}]
  %s8 = sld [smem:[#allocation0]]
  $region38: #{critic_forward.1} parent=0
    _
  %s10 = ssub.s32 1, %s8
  %s11 = scalar_select 0, %s10, %s8
  %12 = sst [smem:[#allocation2]] %s6
  // Predicated region
  $region2: #{critic_forward.1} parent=0 // pred_check
    _
  $region3: #{critic_forward.1} parent=0 // pred_check_branch
    %14 = sbr.rel (0) target = $region5
  $region4: #{critic_forward.1} parent=0 // pred_region
    _
  $region5: #{critic_forward.1} parent=0 // pred_fallthru
    _
  // Predicated region
  $region6: #{critic_forward.1} parent=0 // pred_check
    _
  $region7: #{critic_forward.1} parent=0 // pred_check_branch
    %16 = sbr.rel (0) target = $region9
  $region8: #{critic_forward.1} parent=0 // pred_region
    _
  $region9: #{critic_forward.1} parent=0 // pred_fallthru
    _
  // Predicated region
  $region10: #{critic_forward.1} parent=0 // pred_check
    _
  $region11: #{critic_forward.1} parent=0 // pred_check_branch
    %18 = sbr.rel (0) target = $region13
  $region12: #{critic_forward.1} parent=0 // pred_region
    _
  $region13: #{critic_forward.1} parent=0 // pred_fallthru
    _
  // Predicated region
  $region14: #{critic_forward.1} parent=0 // pred_check
    _
  $region15: #{critic_forward.1} parent=0 // pred_check_branch
    %20 = sbr.rel (0) target = $region17
  $region16: #{critic_forward.1} parent=0 // pred_region
    _
  $region17: #{critic_forward.1} parent=0 // pred_fallthru
    _
  // Predicated region
  $region18: #{critic_forward.1} parent=0 // pred_check
    _
  $region19: #{critic_forward.1} parent=0 // pred_check_branch
    %22 = sbr.rel (0) target = $region21
  $region20: #{critic_forward.1} parent=0 // pred_region
    _
  $region21: #{critic_forward.1} parent=0 // pred_fallthru
    _
  // Predicated region
  $region22: #{critic_forward.1} parent=0 // pred_check
    _
  $region23: #{critic_forward.1} parent=0 // pred_check_branch
    %24 = sbr.rel (0) target = $region25
  $region24: #{critic_forward.1} parent=0 // pred_region
    _
  $region25: #{critic_forward.1} parent=0 // pred_fallthru
    _
  // Predicated region
  $region26: #{critic_forward.1} parent=0 // pred_check
    _
  $region27: #{critic_forward.1} parent=0 // pred_check_branch
    %26 = sbr.rel (0) target = $region29
  $region28: #{critic_forward.1} parent=0 // pred_region
    _
  $region29: #{critic_forward.1} parent=0 // pred_fallthru
    _
  %v27 = vld [vmem:[%s0] sm:$0xff]
  %v28 = vld [vmem:[%s0 + $0x8] sm:$0xff]
  %v29 = vld [vmem:[%s0 + $0x10] sm:$0xff]
  %v30 = vld [vmem:[%s0 + $0x18] sm:$0xff]
  %v31 = vld [vmem:[%s0 + $0x20] sm:$0xff]
  %v32 = vld [vmem:[%s0 + $0x28] sm:$0xff]
  %v33 = vld [vmem:[%s0 + $0x30] sm:$0xff]
  %v34 = vld [vmem:[%s0 + $0x38] sm:$0xff]
  %v35 = vld [vmem:[%s0 + $0x40] sm:$0xff]
  %v36 = vld [vmem:[%s0 + $0x48] sm:$0xff]
  %v37 = vld [vmem:[%s0 + $0x50] sm:$0xff]
  %v38 = vld [vmem:[%s0 + $0x58] sm:$0xff]
  %v39 = vld [vmem:[%s0 + $0x60] sm:$0xff]
  %v40 = vld [vmem:[%s0 + $0x68] sm:$0xff]
  %v41 = vld [vmem:[%s0 + $0x70] sm:$0xff]
  %v42 = vld [vmem:[%s0 + $0x78] sm:$0xff]
  %v43 = vld [vmem:[%s1] sm:$0xff]
  %v44 = vld [vmem:[%s1 + $0x8] sm:$0xff]
  %v45 = vld [vmem:[%s1 + $0x10] sm:$0xff]
  %v46 = vld [vmem:[%s1 + $0x18] sm:$0xff]
  %v47 = vld [vmem:[%s2] sm:$0xff]
  %v48 = vld [vmem:[%s2 + $0x8] sm:$0xff]
  %v49 = vld [vmem:[%s2 + $0x10] sm:$0xff]
  %v50 = vld [vmem:[%s2 + $0x18] sm:$0xff]
  %52 = vset.pattern.permute.xlu0 0
  %53 = vperm.xlu0 %52, %v47
  %v54 = vpop.permute.xlu0 %53
  %57 = vset.pattern.permute.xlu0 0
  %58 = vperm.xlu0 %57, %v48
  %v59 = vpop.permute.xlu0 %58
  %62 = vset.pattern.permute.xlu0 0
  %63 = vperm.xlu0 %62, %v49
  %v64 = vpop.permute.xlu0 %63
  %67 = vset.pattern.permute.xlu0 0
  %68 = vperm.xlu0 %67, %v50
  %v69 = vpop.permute.xlu0 %68
  %vm71 = vcmask 130048
  %v73 = vsel %vm71, %v43, 0
  %v76 = vsel %vm71, %v44, 0
  %v79 = vsel %vm71, %v45, 0
  %v82 = vsel %vm71, %v46, 0
  %v85 = vsel %vm71, %v27, 0
  %v88 = vsel %vm71, %v28, 0
  %v91 = vsel %vm71, %v29, 0
  %v94 = vsel %vm71, %v30, 0
  %v97 = vsel %vm71, %v31, 0
  %v100 = vsel %vm71, %v32, 0
  %v103 = vsel %vm71, %v33, 0
  %v106 = vsel %vm71, %v34, 0
  %v109 = vsel %vm71, %v35, 0
  %v112 = vsel %vm71, %v36, 0
  %v115 = vsel %vm71, %v37, 0
  %v118 = vsel %vm71, %v38, 0
  %v121 = vsel %vm71, %v39, 0
  %v124 = vsel %vm71, %v40, 0
  %v127 = vsel %vm71, %v41, 0
  %v130 = vsel %vm71, %v42, 0
  %132 = vmatprep.subr.mxu0 0.0
  %133 = vmatpush1.xpose.msra.mxu0 %v85
  %134 = vmatprep.subr.mxu0 0.0
  %135 = vmatpush1.xpose.msra.mxu0 %v88
  %136 = vmatprep.subr.mxu0 0.0
  %137 = vmatpush1.xpose.msra.mxu0 %v91
  %138 = vmatprep.subr.mxu0 0.0
  %139 = vmatpush1.xpose.msra.mxu0 %v94
  %140 = vmatprep.subr.mxu0 0.0
  %141 = vmatpush1.xpose.msra.mxu0 %v97
  %142 = vmatprep.subr.mxu0 0.0
  %143 = vmatpush1.xpose.msra.mxu0 %v100
  %144 = vmatprep.subr.mxu0 0.0
  %145 = vmatpush1.xpose.msra.mxu0 %v103
  %146 = vmatprep.subr.mxu0 0.0
  %147 = vmatpush1.xpose.msra.mxu0 %v106
  %148 = vmatprep.subr.mxu0 0.0
  %149 = vmatpush1.xpose.msra.mxu0 %v109
  %150 = vmatprep.subr.mxu0 0.0
  %151 = vmatpush1.xpose.msra.mxu0 %v112
  %152 = vmatprep.subr.mxu0 0.0
  %153 = vmatpush1.xpose.msra.mxu0 %v115
  %154 = vmatprep.subr.mxu0 0.0
  %155 = vmatpush1.xpose.msra.mxu0 %v118
  %156 = vmatprep.subr.mxu0 0.0
  %157 = vmatpush1.xpose.msra.mxu0 %v121
  %158 = vmatprep.subr.mxu0 0.0
  %159 = vmatpush1.xpose.msra.mxu0 %v124
  %160 = vmatprep.subr.mxu0 0.0
  %161 = vmatpush1.xpose.msra.mxu0 %v127
  %162 = vmatprep.subr.mxu0 0.0
  %163 = vmatpush1.xpose.msra.mxu0 %v130
  %164 = vmatprep.subr.mxu0 0.0
  %165 = vmatpush1.xpose.msra.mxu0 0.0
  %166 = vmatprep.subr.mxu0 0.0
  %167 = vmatpush1.xpose.msra.mxu0 0.0
  %168 = vmatprep.subr.mxu0 0.0
  %169 = vmatpush1.xpose.msra.mxu0 0.0
  %170 = vmatprep.subr.mxu0 0.0
  %171 = vmatpush1.xpose.msra.mxu0 0.0
  %172 = vmatprep.subr.mxu0 0.0
  %173 = vmatpush1.xpose.msra.mxu0 0.0
  %174 = vmatprep.subr.mxu0 0.0
  %175 = vmatpush1.xpose.msra.mxu0 0.0
  %176 = vmatprep.subr.mxu0 0.0
  %177 = vmatpush1.xpose.msra.mxu0 0.0
  %178 = vmatprep.subr.mxu0 0.0
  %179 = vmatpush1.xpose.msra.mxu0 0.0
  %180 = vmatprep.subr.mxu0 0.0
  %181 = vmatpush1.xpose.msra.mxu0 0.0
  %182 = vmatprep.subr.mxu0 0.0
  %183 = vmatpush1.xpose.msra.mxu0 0.0
  %184 = vmatprep.subr.mxu0 0.0
  %185 = vmatpush1.xpose.msra.mxu0 0.0
  %186 = vmatprep.subr.mxu0 0.0
  %187 = vmatpush1.xpose.msra.mxu0 0.0
  %188 = vmatprep.subr.mxu0 0.0
  %189 = vmatpush1.xpose.msra.mxu0 0.0
  %190 = vmatprep.subr.mxu0 0.0
  %191 = vmatpush1.xpose.msra.mxu0 0.0
  %192 = vmatprep.subr.mxu0 0.0
  %193 = vmatpush1.xpose.msra.mxu0 0.0
  %194 = vmatprep.subr.mxu0 0.0
  %195 = vmatpush1.xpose.msra.mxu0 0.0
  %196 = vmatprep.mubr.f32.mxu0 0.0
  %197 = vmatmul.mubr.f32.gmra.mrb[0].mxu0 %v73
  %v198 = vpop.f32.mrb[0].mxu0
  %v199 = vadd.f32 %v54, %v198
  %v200 = vpop.f32.mrb[0].mxu0
  %201 = vmatprep.mubr.f32.mxu0 0.0
  %202 = vmatmul.mubr.f32.gmra.mrb[0].mxu0 %v76
  %v203 = vpop.f32.mrb[0].mxu0
  %v204 = vadd.f32 %v59, %v203
  %v205 = vpop.f32.mrb[0].mxu0
  %206 = vmatprep.mubr.f32.mxu0 0.0
  %207 = vmatmul.mubr.f32.gmra.mrb[0].mxu0 %v79
  %v208 = vpop.f32.mrb[0].mxu0
  %v209 = vadd.f32 %v64, %v208
  %v210 = vpop.f32.mrb[0].mxu0
  %211 = vmatprep.mubr.f32.mxu0 0.0
  %212 = vmatmul.mubr.f32.gmra.mrb[0].mxu0 %v82
  %v213 = vpop.f32.mrb[0].mxu0
  %v214 = vadd.f32 %v69, %v213
  %v215 = vpop.f32.mrb[0].mxu0
  %216 = vdwg.mxu0
  %v217 = vtanh.pop %v199
  %v218 = vtanh.pop %v204
  %v219 = vtanh.pop %v209
  %v220 = vtanh.pop %v214
  %v221 = vld [vmem:[%s3] sm:$0xff]
  %v222 = vld [vmem:[%s3 + $0x8] sm:$0xff]
  %v223 = vld [vmem:[%s3 + $0x10] sm:$0xff]
  %v224 = vld [vmem:[%s3 + $0x18] sm:$0xff]
  %v225 = vld [vmem:[%s4] sm:$0xff]
  %v226 = vld [vmem:[%s4 + $0x8] sm:$0xff]
  %v227 = vld [vmem:[%s4 + $0x10] sm:$0xff]
  %v228 = vld [vmem:[%s4 + $0x18] sm:$0xff]
  %230 = vset.pattern.permute.xlu0 0
  %231 = vperm.xlu0 %230, %v225
  %v232 = vpop.permute.xlu0 %231
  %235 = vset.pattern.permute.xlu0 0
  %236 = vperm.xlu0 %235, %v226
  %v237 = vpop.permute.xlu0 %236
  %240 = vset.pattern.permute.xlu0 0
  %241 = vperm.xlu0 %240, %v227
  %v242 = vpop.permute.xlu0 %241
  %245 = vset.pattern.permute.xlu0 0
  %246 = vperm.xlu0 %245, %v228
  %v247 = vpop.permute.xlu0 %246
  %vm249 = vcmask 261120
  %v251 = vsel %vm249, %v221, 0
  %v254 = vsel %vm249, %v222, 0
  %v257 = vsel %vm249, %v223, 0
  %v260 = vsel %vm249, %v224, 0
  %262 = vmatprep.subr.mxu0 0.0
  %263 = vmatpush1.msra.mxu0 %v217
  %264 = vmatprep.subr.mxu0 0.0
  %265 = vmatpush1.msra.mxu0 %v218
  %266 = vmatprep.subr.mxu0 0.0
  %267 = vmatpush1.msra.mxu0 %v219
  %268 = vmatprep.subr.mxu0 0.0
  %269 = vmatpush1.msra.mxu0 %v220
  %270 = vmatprep.subr.mxu0 0.0
  %271 = vmatpush1.msra.mxu0 0.0
  %272 = vmatprep.subr.mxu0 0.0
  %273 = vmatpush1.msra.mxu0 0.0
  %274 = vmatprep.subr.mxu0 0.0
  %275 = vmatpush1.msra.mxu0 0.0
  %276 = vmatprep.subr.mxu0 0.0
  %277 = vmatpush1.msra.mxu0 0.0
  %278 = vmatprep.subr.mxu0 0.0
  %279 = vmatpush1.msra.mxu0 0.0
  %280 = vmatprep.subr.mxu0 0.0
  %281 = vmatpush1.msra.mxu0 0.0
  %282 = vmatprep.subr.mxu0 0.0
  %283 = vmatpush1.msra.mxu0 0.0
  %284 = vmatprep.subr.mxu0 0.0
  %285 = vmatpush1.msra.mxu0 0.0
  %286 = vmatprep.subr.mxu0 0.0
  %287 = vmatpush1.msra.mxu0 0.0
  %288 = vmatprep.subr.mxu0 0.0
  %289 = vmatpush1.msra.mxu0 0.0
  %290 = vmatprep.subr.mxu0 0.0
  %291 = vmatpush1.msra.mxu0 0.0
  %292 = vmatprep.subr.mxu0 0.0
  %293 = vmatpush1.msra.mxu0 0.0
  %294 = vmatprep.subr.mxu0 0.0
  %295 = vmatpush1.msra.mxu0 0.0
  %296 = vmatprep.subr.mxu0 0.0
  %297 = vmatpush1.msra.mxu0 0.0
  %298 = vmatprep.subr.mxu0 0.0
  %299 = vmatpush1.msra.mxu0 0.0
  %300 = vmatprep.subr.mxu0 0.0
  %301 = vmatpush1.msra.mxu0 0.0
  %302 = vmatprep.subr.mxu0 0.0
  %303 = vmatpush1.msra.mxu0 0.0
  %304 = vmatprep.subr.mxu0 0.0
  %305 = vmatpush1.msra.mxu0 0.0
  %306 = vmatprep.subr.mxu0 0.0
  %307 = vmatpush1.msra.mxu0 0.0
  %308 = vmatprep.subr.mxu0 0.0
  %309 = vmatpush1.msra.mxu0 0.0
  %310 = vmatprep.subr.mxu0 0.0
  %311 = vmatpush1.msra.mxu0 0.0
  %312 = vmatprep.subr.mxu0 0.0
  %313 = vmatpush1.msra.mxu0 0.0
  %314 = vmatprep.subr.mxu0 0.0
  %315 = vmatpush1.msra.mxu0 0.0
  %316 = vmatprep.subr.mxu0 0.0
  %317 = vmatpush1.msra.mxu0 0.0
  %318 = vmatprep.subr.mxu0 0.0
  %319 = vmatpush1.msra.mxu0 0.0
  %320 = vmatprep.subr.mxu0 0.0
  %321 = vmatpush1.msra.mxu0 0.0
  %322 = vmatprep.subr.mxu0 0.0
  %323 = vmatpush1.msra.mxu0 0.0
  %324 = vmatprep.subr.mxu0 0.0
  %325 = vmatpush1.msra.mxu0 0.0
  %326 = vmatprep.mubr.f32.mxu0 0.0
  %327 = vmatmul.mubr.f32.gmra.mrb[0].mxu0 %v251
  %v328 = vpop.f32.mrb[0].mxu0
  %v329 = vadd.f32 %v232, %v328
  %v330 = vpop.f32.mrb[0].mxu0
  %331 = vmatprep.mubr.f32.mxu0 0.0
  %332 = vmatmul.mubr.f32.gmra.mrb[0].mxu0 %v254
  %v333 = vpop.f32.mrb[0].mxu0
  %v334 = vadd.f32 %v237, %v333
  %v335 = vpop.f32.mrb[0].mxu0
  %336 = vmatprep.mubr.f32.mxu0 0.0
  %337 = vmatmul.mubr.f32.gmra.mrb[0].mxu0 %v257
  %v338 = vpop.f32.mrb[0].mxu0
  %v339 = vadd.f32 %v242, %v338
  %v340 = vpop.f32.mrb[0].mxu0
  %341 = vmatprep.mubr.f32.mxu0 0.0
  %342 = vmatmul.mubr.f32.gmra.mrb[0].mxu0 %v260
  %v343 = vpop.f32.mrb[0].mxu0
  %v344 = vadd.f32 %v247, %v343
  %v345 = vpop.f32.mrb[0].mxu0
  %346 = vdwg.mxu0
  %v347 = vtanh.pop %v329
  %v348 = vtanh.pop %v334
  %v349 = vtanh.pop %v339
  %v350 = vtanh.pop %v344
  %v351 = vld [vmem:[%s5] sm:$0xff]
  %v352 = vld [vmem:[%s5 + $0x8] sm:$0xff]
  %v353 = vld [vmem:[%s5 + $0x10] sm:$0xff]
  %v354 = vld [vmem:[%s5 + $0x18] sm:$0xff]
  %356 = vset.pattern.permute.xlu0 0
  %357 = vperm.xlu0 %356, %v351
  %v358 = vpop.permute.xlu0 %357
  %361 = vset.pattern.permute.xlu0 0
  %362 = vperm.xlu0 %361, %v352
  %v363 = vpop.permute.xlu0 %362
  %366 = vset.pattern.permute.xlu0 0
  %367 = vperm.xlu0 %366, %v353
  %v368 = vpop.permute.xlu0 %367
  %371 = vset.pattern.permute.xlu0 0
  %372 = vperm.xlu0 %371, %v354
  %v373 = vpop.permute.xlu0 %372
  %v375 = vmul.f32 %v347, %v358
  %v376 = vmul.f32 %v348, %v363
  %v377 = vmul.f32 %v349, %v368
  %v378 = vmul.f32 %v350, %v373
  %v379 = vadd.f32 %v375, %v376
  %v380 = vadd.f32 %v379, %v377
  %v381 = vadd.f32 %v380, %v378
  %v382 = vrot.slane %v381, 4
  %v383 = vadd.f32 %v381, %v382
  %v384 = vrot.slane %v383, 2
  %v385 = vadd.f32 %v383, %v384
  %v386 = vrot.slane %v385, 1
  %v387 = vadd.f32 %v385, %v386
  %s388 = sld [smem:[#allocation2]]
  %v389 = vstv %s388
  %v390 = vadd.f32 %v387, %v389
  %391 = vst [vmem:[%s7] sm:$0x1] %v390
  // Predicated region
  $region30: #{critic_forward.1} parent=0 // pred_check
    _
  $region31: #{critic_forward.1} parent=0 // pred_check_branch
    %393 = sbr.rel (0) target = $region33
  $region32: #{critic_forward.1} parent=0 // pred_region
    _
  $region33: #{critic_forward.1} parent=0 // pred_fallthru
    _
  // Predicated region
  $region34: #{critic_forward.1} parent=0 // pred_check
    _
  $region35: #{critic_forward.1} parent=0 // pred_check_branch
    %395 = sbr.rel (0) target = $region37
  $region36: #{critic_forward.1} parent=0 // pred_region
    _
  $region37: #{critic_forward.1} parent=0 // pred_fallthru
    _

</llo_original>
